<compile_context>
chip_gen: v7x
topology: tpu7x:2x2x1
jax: 0.10.0
libtpu: 0.0.40
codegen_flags: <defaults>
</compile_context>

<pallas_src>
import jax
import jax.numpy as jnp
from jax.experimental import pallas as pl
from jax.experimental.pallas import tpu as pltpu

LANE = 128
SUBLANE = 8


def _round_up(n, m):
    return ((n + m - 1) // m) * m


def xor_net_kernel(w1_ref, b1_ref, w2_ref, b2_ref, x_ref, o_ref):
    # x_ref: [2, TILE_ROWS, 128] in VMEM (feature, batch-sublane-row, batch-lane).
    # o_ref: [TILE_ROWS, 128] dense output tile.
    # w1_ref [2,4], b1_ref [4], w2_ref [4,1], b2_ref [1]: scalars in SMEM.
    x0 = x_ref[0]                        # [TILE_ROWS, 128]
    x1 = x_ref[1]                        # [TILE_ROWS, 128]

    # Hidden layer (4 neurons) + output neuron, fully unrolled on VPU/EUP.
    terms = []
    for j in range(4):
        pre_h = x0 * w1_ref[0, j] + x1 * w1_ref[1, j] + b1_ref[j]   # 2 FMAs
        terms.append(jax.nn.sigmoid(pre_h) * w2_ref[j, 0])          # EUP + mul
    pre_o = (terms[0] + terms[1]) + (terms[2] + terms[3]) + b2_ref[0]
    o_ref[...] = jax.nn.sigmoid(pre_o).astype(o_ref.dtype)          # [TILE_ROWS, 128]


def xor_net_forward_packed(x_packed, w1, b1, w2, b2, *, tile_rows=4096):
    """x_packed: [2, R, 128] float32 (feature, batch//128, batch%128).

    Returns the dense [R, 128] sigmoid output slab (no wrapper-side repacking).
    R must be a multiple of `tile_rows` (or of 8 if tile_rows >= R).
    """
    nfeat, R, lanes = x_packed.shape
    assert nfeat == 2 and lanes == LANE
    tile = min(tile_rows, R)
    assert tile % SUBLANE == 0 and R % tile == 0, (R, tile)
    grid = (R // tile,)

    smem = pl.BlockSpec(memory_space=pltpu.SMEM)   # 13 scalars, no VMEM tiles
    return pl.pallas_call(
        xor_net_kernel,
        out_shape=jax.ShapeDtypeStruct((R, LANE), jnp.float32),
        grid=grid,
        in_specs=[
            smem,                                               # w1 [2, 4]
            smem,                                               # b1 [4]
            smem,                                               # w2 [4, 1]
            smem,                                               # b2 [1]
            pl.BlockSpec((2, tile, LANE), lambda i: (0, i, 0)),  # x  [2, T, 128]
        ],
        out_specs=pl.BlockSpec((tile, LANE), lambda i: (i, 0)),
        compiler_params=pltpu.CompilerParams(
            dimension_semantics=("parallel",),        # v7x: shard across 2 TCs
            vmem_limit_bytes=32 * 1024 * 1024),       # headroom above v5e's 16 MiB
    )(w1.astype(jnp.float32), b1.astype(jnp.float32),
      w2.astype(jnp.float32), b2.astype(jnp.float32), x_packed)


def xor_net_forward(x, w1, b1, w2, b2, *, tile_rows=4096):
    """x: [B, 2]; w1: [2, 4]; b1: [4]; w2: [4, 1]; b2: [1] -> [B, 1] (float32).

    For large-B production use, prefer xor_net_forward_packed with a
    pre-packed [2, R, 128] input to skip the one-time pad+transpose here.
    """
    B = x.shape[0]
    rows = pl.cdiv(B, LANE)
    tile = min(_round_up(tile_rows, SUBLANE), _round_up(rows, SUBLANE))
    R = _round_up(rows, tile)
    b_pad = R * LANE

    # One pad+transpose; the (2, b_pad) -> (2, R, 128) reshape is a free view.
    xT = jnp.zeros((2, b_pad), jnp.float32).at[:, :B].set(
        x.astype(jnp.float32).T)
    x_packed = xT.reshape(2, R, LANE)

    out = xor_net_forward_packed(x_packed, w1, b1, w2, b2, tile_rows=tile)
    return out.reshape(b_pad)[:B].reshape(B, 1)


def init_params(key):
    """Deterministic init mimicking torch.nn.Linear (U(-1/sqrt(fan_in), +1/sqrt(fan_in)))."""
    k1, k2, k3, k4 = jax.random.split(key, 4)
    bound1 = 1.0 / jnp.sqrt(2.0)   # hidden: fan_in = 2
    bound2 = 1.0 / jnp.sqrt(4.0)   # output: fan_in = 4
    # Stored already transposed: [in, out]
    w1 = jax.random.uniform(k1, (2, 4), jnp.float32, -bound1, bound1)
    b1 = jax.random.uniform(k2, (4,), jnp.float32, -bound1, bound1)
    w2 = jax.random.uniform(k3, (4, 1), jnp.float32, -bound2, bound2)
    b2 = jax.random.uniform(k4, (1,), jnp.float32, -bound2, bound2)
    return w1, b1, w2, b2


def _ref_forward(x, w1, b1, w2, b2):
    h = jax.nn.sigmoid(x.astype(jnp.float32) @ w1 + b1)
    return jax.nn.sigmoid(h @ w2 + b2)


if __name__ == "__main__":
    key = jax.random.PRNGKey(0)
    w1, b1, w2, b2 = init_params(key)

    # Classic XOR truth-table inputs, batch = 4 (padded to one 8x128 tile inside).
    x = jnp.array([[0.0, 0.0],
                   [0.0, 1.0],
                   [1.0, 0.0],
                   [1.0, 1.0]], dtype=jnp.float32)

    out = jax.block_until_ready(xor_net_forward(x, w1, b1, w2, b2))
    ref = _ref_forward(x, w1, b1, w2, b2)
    assert out.shape == (4, 1)
    assert jnp.allclose(out, ref, atol=1e-5), (out, ref)

    # Exercise the multi-tile grid path (grid > 1) with a non-aligned batch.
    xb = jax.random.uniform(jax.random.PRNGKey(1), (2500, 2), jnp.float32)
    out_b = jax.block_until_ready(
        xor_net_forward(xb, w1, b1, w2, b2, tile_rows=8))
    ref_b = _ref_forward(xb, w1, b1, w2, b2)
    assert out_b.shape == (2500, 1)
    assert jnp.allclose(out_b, ref_b, atol=1e-5)

    print("KERNEL_OK")
</pallas_src>

<mosaic_0001>
module attributes {stable_mosaic.version = 11 : i64} {
  func.func @xor_net_kernel(%arg0: i32, %arg1: memref<2x4xf32, #tpu.memory_space<smem>>, %arg2: memref<4xf32, #tpu.memory_space<smem>>, %arg3: memref<4x1xf32, #tpu.memory_space<smem>>, %arg4: memref<1xf32, #tpu.memory_space<smem>>, %arg5: memref<2x8x128xf32, #tpu.memory_space<vmem>>, %arg6: memref<8x128xf32, #tpu.memory_space<vmem>>) attributes {dimension_semantics = [#tpu.dimension_semantics<parallel>], iteration_bounds = array<i64: 1>, scalar_prefetch = 0 : i64, scratch_operands = 0 : i64, tpu.core_type = #tpu.core_type<tc>, window_params = [{transform_indices = @transform_0, window_bounds = array<i64: 2, 4>}, {transform_indices = @transform_1, window_bounds = array<i64: 4>}, {transform_indices = @transform_2, window_bounds = array<i64: 4, 1>}, {transform_indices = @transform_3, window_bounds = array<i64: 1>}, {transform_indices = @transform_4, window_bounds = array<i64: 2, 8, 128>}, {transform_indices = @transform_5, window_bounds = array<i64: 8, 128>}]} {
    %c0 = arith.constant 0 : index
    %c0_0 = arith.constant 0 : index
    %c0_1 = arith.constant 0 : index
    %0 = vector.load %arg5[%c0, %c0_0, %c0_1] : memref<2x8x128xf32, #tpu.memory_space<vmem>>, vector<1x8x128xf32>
    %1 = vector.shape_cast %0 : vector<1x8x128xf32> to vector<8x128xf32>
    %c1 = arith.constant 1 : index
    %c0_2 = arith.constant 0 : index
    %c0_3 = arith.constant 0 : index
    %2 = vector.load %arg5[%c1, %c0_2, %c0_3] : memref<2x8x128xf32, #tpu.memory_space<vmem>>, vector<1x8x128xf32>
    %3 = vector.shape_cast %2 : vector<1x8x128xf32> to vector<8x128xf32>
    %c0_4 = arith.constant 0 : index
    %c0_5 = arith.constant 0 : index
    %4 = memref.load %arg1[%c0_4, %c0_5] : memref<2x4xf32, #tpu.memory_space<smem>>
    %5 = vector.broadcast %4 : f32 to vector<8x128xf32>
    %6 = arith.mulf %1, %5 : vector<8x128xf32>
    %c1_6 = arith.constant 1 : index
    %c0_7 = arith.constant 0 : index
    %7 = memref.load %arg1[%c1_6, %c0_7] : memref<2x4xf32, #tpu.memory_space<smem>>
    %8 = vector.broadcast %7 : f32 to vector<8x128xf32>
    %9 = arith.mulf %3, %8 : vector<8x128xf32>
    %10 = arith.addf %6, %9 : vector<8x128xf32>
    %c0_8 = arith.constant 0 : index
    %11 = memref.load %arg2[%c0_8] : memref<4xf32, #tpu.memory_space<smem>>
    %12 = vector.broadcast %11 : f32 to vector<8x128xf32>
    %13 = arith.addf %10, %12 : vector<8x128xf32>
    %14 = arith.negf %13 : vector<8x128xf32>
    %15 = math.exp %14 : vector<8x128xf32>
    %cst = arith.constant 1.000000e+00 : f32
    %16 = vector.broadcast %cst : f32 to vector<8x128xf32>
    %17 = arith.addf %16, %15 : vector<8x128xf32>
    %18 = arith.divf %16, %17 : vector<8x128xf32>
    %c0_9 = arith.constant 0 : index
    %c0_10 = arith.constant 0 : index
    %19 = memref.load %arg3[%c0_9, %c0_10] : memref<4x1xf32, #tpu.memory_space<smem>>
    %20 = vector.broadcast %19 : f32 to vector<8x128xf32>
    %21 = arith.mulf %18, %20 : vector<8x128xf32>
    %c0_11 = arith.constant 0 : index
    %c1_12 = arith.constant 1 : index
    %22 = memref.load %arg1[%c0_11, %c1_12] : memref<2x4xf32, #tpu.memory_space<smem>>
    %23 = vector.broadcast %22 : f32 to vector<8x128xf32>
    %24 = arith.mulf %1, %23 : vector<8x128xf32>
    %c1_13 = arith.constant 1 : index
    %c1_14 = arith.constant 1 : index
    %25 = memref.load %arg1[%c1_13, %c1_14] : memref<2x4xf32, #tpu.memory_space<smem>>
    %26 = vector.broadcast %25 : f32 to vector<8x128xf32>
    %27 = arith.mulf %3, %26 : vector<8x128xf32>
    %28 = arith.addf %24, %27 : vector<8x128xf32>
    %c1_15 = arith.constant 1 : index
    %29 = memref.load %arg2[%c1_15] : memref<4xf32, #tpu.memory_space<smem>>
    %30 = vector.broadcast %29 : f32 to vector<8x128xf32>
    %31 = arith.addf %28, %30 : vector<8x128xf32>
    %32 = arith.negf %31 : vector<8x128xf32>
    %33 = math.exp %32 : vector<8x128xf32>
    %cst_16 = arith.constant 1.000000e+00 : f32
    %34 = vector.broadcast %cst_16 : f32 to vector<8x128xf32>
    %35 = arith.addf %34, %33 : vector<8x128xf32>
    %36 = arith.divf %34, %35 : vector<8x128xf32>
    %c1_17 = arith.constant 1 : index
    %c0_18 = arith.constant 0 : index
    %37 = memref.load %arg3[%c1_17, %c0_18] : memref<4x1xf32, #tpu.memory_space<smem>>
    %38 = vector.broadcast %37 : f32 to vector<8x128xf32>
    %39 = arith.mulf %36, %38 : vector<8x128xf32>
    %c0_19 = arith.constant 0 : index
    %c2 = arith.constant 2 : index
    %40 = memref.load %arg1[%c0_19, %c2] : memref<2x4xf32, #tpu.memory_space<smem>>
    %41 = vector.broadcast %40 : f32 to vector<8x128xf32>
    %42 = arith.mulf %1, %41 : vector<8x128xf32>
    %c1_20 = arith.constant 1 : index
    %c2_21 = arith.constant 2 : index
    %43 = memref.load %arg1[%c1_20, %c2_21] : memref<2x4xf32, #tpu.memory_space<smem>>
    %44 = vector.broadcast %43 : f32 to vector<8x128xf32>
    %45 = arith.mulf %3, %44 : vector<8x128xf32>
    %46 = arith.addf %42, %45 : vector<8x128xf32>
    %c2_22 = arith.constant 2 : index
    %47 = memref.load %arg2[%c2_22] : memref<4xf32, #tpu.memory_space<smem>>
    %48 = vector.broadcast %47 : f32 to vector<8x128xf32>
    %49 = arith.addf %46, %48 : vector<8x128xf32>
    %50 = arith.negf %49 : vector<8x128xf32>
    %51 = math.exp %50 : vector<8x128xf32>
    %cst_23 = arith.constant 1.000000e+00 : f32
    %52 = vector.broadcast %cst_23 : f32 to vector<8x128xf32>
    %53 = arith.addf %52, %51 : vector<8x128xf32>
    %54 = arith.divf %52, %53 : vector<8x128xf32>
    %c2_24 = arith.constant 2 : index
    %c0_25 = arith.constant 0 : index
    %55 = memref.load %arg3[%c2_24, %c0_25] : memref<4x1xf32, #tpu.memory_space<smem>>
    %56 = vector.broadcast %55 : f32 to vector<8x128xf32>
    %57 = arith.mulf %54, %56 : vector<8x128xf32>
    %c0_26 = arith.constant 0 : index
    %c3 = arith.constant 3 : index
    %58 = memref.load %arg1[%c0_26, %c3] : memref<2x4xf32, #tpu.memory_space<smem>>
    %59 = vector.broadcast %58 : f32 to vector<8x128xf32>
    %60 = arith.mulf %1, %59 : vector<8x128xf32>
    %c1_27 = arith.constant 1 : index
    %c3_28 = arith.constant 3 : index
    %61 = memref.load %arg1[%c1_27, %c3_28] : memref<2x4xf32, #tpu.memory_space<smem>>
    %62 = vector.broadcast %61 : f32 to vector<8x128xf32>
    %63 = arith.mulf %3, %62 : vector<8x128xf32>
    %64 = arith.addf %60, %63 : vector<8x128xf32>
    %c3_29 = arith.constant 3 : index
    %65 = memref.load %arg2[%c3_29] : memref<4xf32, #tpu.memory_space<smem>>
    %66 = vector.broadcast %65 : f32 to vector<8x128xf32>
    %67 = arith.addf %64, %66 : vector<8x128xf32>
    %68 = arith.negf %67 : vector<8x128xf32>
    %69 = math.exp %68 : vector<8x128xf32>
    %cst_30 = arith.constant 1.000000e+00 : f32
    %70 = vector.broadcast %cst_30 : f32 to vector<8x128xf32>
    %71 = arith.addf %70, %69 : vector<8x128xf32>
    %72 = arith.divf %70, %71 : vector<8x128xf32>
    %c3_31 = arith.constant 3 : index
    %c0_32 = arith.constant 0 : index
    %73 = memref.load %arg3[%c3_31, %c0_32] : memref<4x1xf32, #tpu.memory_space<smem>>
    %74 = vector.broadcast %73 : f32 to vector<8x128xf32>
    %75 = arith.mulf %72, %74 : vector<8x128xf32>
    %76 = arith.addf %21, %39 : vector<8x128xf32>
    %77 = arith.addf %57, %75 : vector<8x128xf32>
    %78 = arith.addf %76, %77 : vector<8x128xf32>
    %c0_33 = arith.constant 0 : index
    %79 = memref.load %arg4[%c0_33] : memref<1xf32, #tpu.memory_space<smem>>
    %80 = vector.broadcast %79 : f32 to vector<8x128xf32>
    %81 = arith.addf %78, %80 : vector<8x128xf32>
    %82 = arith.negf %81 : vector<8x128xf32>
    %83 = math.exp %82 : vector<8x128xf32>
    %cst_34 = arith.constant 1.000000e+00 : f32
    %84 = vector.broadcast %cst_34 : f32 to vector<8x128xf32>
    %85 = arith.addf %84, %83 : vector<8x128xf32>
    %86 = arith.divf %84, %85 : vector<8x128xf32>
    %c0_35 = arith.constant 0 : index
    %c0_36 = arith.constant 0 : index
    %87 = vector.load %arg6[%c0_35, %c0_36] : memref<8x128xf32, #tpu.memory_space<vmem>>, vector<8x128xf32>
    tpu.vector_store %arg6[%c0_35, %c0_36], %86 {strides = array<i32>} : memref<8x128xf32, #tpu.memory_space<vmem>>, vector<8x128xf32>,
    return
  }
  func.func @transform_0(%arg0: i32) -> (i32, i32) {
    %c0_i32 = arith.constant 0 : i32
    %c0_i32_0 = arith.constant 0 : i32
    %c0_i32_1 = arith.constant 0 : i32
    return %c0_i32, %c0_i32_0 : i32, i32
  }
  func.func @transform_1(%arg0: i32) -> i32 {
    %c0_i32 = arith.constant 0 : i32
    %c0_i32_0 = arith.constant 0 : i32
    return %c0_i32 : i32
  }
  func.func @transform_2(%arg0: i32) -> (i32, i32) {
    %c0_i32 = arith.constant 0 : i32
    %c0_i32_0 = arith.constant 0 : i32
    %c0_i32_1 = arith.constant 0 : i32
    return %c0_i32, %c0_i32_0 : i32, i32
  }
  func.func @transform_3(%arg0: i32) -> i32 {
    %c0_i32 = arith.constant 0 : i32
    %c0_i32_0 = arith.constant 0 : i32
    return %c0_i32 : i32
  }
  func.func @transform_4(%arg0: i32) -> (i32, i32, i32) {
    %c0_i32 = arith.constant 0 : i32
    %c0_i32_0 = arith.constant 0 : i32
    %c0_i32_1 = arith.constant 0 : i32
    return %c0_i32, %arg0, %c0_i32_0 : i32, i32, i32
  }
  func.func @transform_5(%arg0: i32) -> (i32, i32) {
    %c0_i32 = arith.constant 0 : i32
    %c0_i32_0 = arith.constant 0 : i32
    return %arg0, %c0_i32 : i32, i32
  }
}

</mosaic_0001>

<llo_original>
// kernel: tpu_custom_call.1
$region0: #{tpu_custom_call.1}
  #allocation0 [shape = 'u32[]', space=smem, size = 0x4, offset = 0x4, fixed_abs, tag = 'smem constant byte address 0x4 - core index']
  #allocation1 [shape = 'u32[144,128]{1,0:T(1,128)}', space=vmem, size = 0x12000, scoped, tag = 'internal scratch']
  #allocation2 [shape = 'f32[1]{0:T(128)S(6)}', space=smem, size = 0x200, scoped, tag = 'scoped memory for tpu_custom_call.1']
  %s0 = inlined_call_operand.vmem [shape: f32[2,4], index: 0, kind: input, shape index: {}]
  %s1 = inlined_call_operand.vmem [shape: f32[4], index: 1, kind: input, shape index: {}]
  %s2 = inlined_call_operand.vmem [shape: f32[4,1], index: 2, kind: input, shape index: {}]
  %s3 = inlined_call_operand.<no memory space> [shape: f32[1], index: 3, kind: input, shape index: {}]
  %s4 = inlined_call_operand.vmem [shape: f32[2,8,128], index: 4, kind: input, shape index: {}]
  %s5 = inlined_call_operand.hbm [shape: f32[8,128], index: 5, kind: output, shape index: {}]
  %s6 = sld [smem:[#allocation0]]
  $region42: #{tpu_custom_call.1} parent=0
    _
  %s8 = ssub.s32 1, %s6
  %s9 = scalar_select 0, %s8, %s6
  %10 = sst [smem:[#allocation2]] %s3
  $region1: #{tpu_custom_call.1} parent=0
    #allocation3 [shape = 'u8[1024]{0}', space=smem, size = 0x400, scoped, tag = 'input window, operand 0, single buffered']
    #allocation4 [shape = 's32[1]{0}', space=sflag, size = 0x4, scoped, tag = 'scoped memory for tpu_custom_call.1']
    #allocation5 [shape = 's32[1]{0}', space=sflag, size = 0x4, scoped, tag = 'scoped memory for tpu_custom_call.1']
    #allocation6 [shape = 'u8[512]{0}', space=smem, size = 0x200, scoped, tag = 'input window, operand 1, single buffered']
    #allocation7 [shape = 's32[1]{0}', space=sflag, size = 0x4, scoped, tag = 'scoped memory for tpu_custom_call.1']
    #allocation8 [shape = 'u8[2048]{0}', space=smem, size = 0x800, scoped, tag = 'input window, operand 2, single buffered']
    #allocation9 [shape = 'u8[4096]{0}', space=vmem, size = 0x1000, scoped, tag = 'output window, operand 0, single buffered']
    %11 = vsyncpa [#allocation5], 0
    %12 = vsyncpa [#allocation7], 0
    %13 = vsyncpa [#allocation4], 0
    // Predicated region
    $region2: #{tpu_custom_call.1} parent=1 // pred_check
      _
    $region3: #{tpu_custom_call.1} parent=1 // pred_check_branch
      %15 = sbr.rel (0) target = $region5
    $region4: #{tpu_custom_call.1} parent=1 // pred_region
      %s17 = ssub.s32 32, 32
      %18 = vsyncadd [#allocation5], %s17
      %s20 = sshll.u32 %s0, 4
      %s21 = int_to_ptr.vmem [resolvable:$true] %s20
      %23 = dma.vmem_to_smem %s21, 32, [#allocation3], [#allocation5]
    $region5: #{tpu_custom_call.1} parent=1 // pred_fallthru
      _
    // Predicated region
    $region6: #{tpu_custom_call.1} parent=1 // pred_check
      _
    $region7: #{tpu_custom_call.1} parent=1 // pred_check_branch
      %25 = sbr.rel (0) target = $region9
    $region8: #{tpu_custom_call.1} parent=1 // pred_region
      %s27 = ssub.s32 16, 16
      %28 = vsyncadd [#allocation7], %s27
      %s30 = sshll.u32 %s1, 4
      %s31 = int_to_ptr.vmem [resolvable:$true] %s30
      %33 = dma.vmem_to_smem %s31, 16, [#allocation6], [#allocation7]
    $region9: #{tpu_custom_call.1} parent=1 // pred_fallthru
      _
    // Predicated region
    $region10: #{tpu_custom_call.1} parent=1 // pred_check
      _
    $region11: #{tpu_custom_call.1} parent=1 // pred_check_branch
      %35 = sbr.rel (0) target = $region13
    $region12: #{tpu_custom_call.1} parent=1 // pred_region
      %s37 = ssub.s32 64, 64
      %38 = vsyncadd [#allocation7], %s37
      %s40 = sshll.u32 %s2, 4
      %s41 = int_to_ptr.vmem [resolvable:$true] %s40
      %43 = dma.vmem_to_smem %s41, 64, [#allocation8], [#allocation7]
    $region13: #{tpu_custom_call.1} parent=1 // pred_fallthru
      _
    // Predicated region
    $region14: #{tpu_custom_call.1} parent=1 // pred_check
      _
    $region15: #{tpu_custom_call.1} parent=1 // pred_check_branch
      %45 = sbr.rel (0) target = $region17
    $region16: #{tpu_custom_call.1} parent=1 // pred_region
      _
    $region17: #{tpu_custom_call.1} parent=1 // pred_fallthru
      _
    // Predicated region
    $region18: #{tpu_custom_call.1} parent=1 // pred_check
      _
    $region19: #{tpu_custom_call.1} parent=1 // pred_check_branch
      %47 = sbr.rel (0) target = $region21
    $region20: #{tpu_custom_call.1} parent=1 // pred_region
      _
    $region21: #{tpu_custom_call.1} parent=1 // pred_fallthru
      _
    // Predicated region
    $region22: #{tpu_custom_call.1} parent=1 // pred_check
      _
    $region23: #{tpu_custom_call.1} parent=1 // pred_check_branch
      %49 = sbr.rel (0) target = $region25
    $region24: #{tpu_custom_call.1} parent=1 // pred_region
      %50 = dma.done [#allocation5], 32
    $region25: #{tpu_custom_call.1} parent=1 // pred_fallthru
      _
    // Predicated region
    $region26: #{tpu_custom_call.1} parent=1 // pred_check
      _
    $region27: #{tpu_custom_call.1} parent=1 // pred_check_branch
      %52 = sbr.rel (0) target = $region29
    $region28: #{tpu_custom_call.1} parent=1 // pred_region
      %53 = dma.done [#allocation7], 16
    $region29: #{tpu_custom_call.1} parent=1 // pred_fallthru
      _
    // Predicated region
    $region30: #{tpu_custom_call.1} parent=1 // pred_check
      _
    $region31: #{tpu_custom_call.1} parent=1 // pred_check_branch
      %55 = sbr.rel (0) target = $region33
    $region32: #{tpu_custom_call.1} parent=1 // pred_region
      %56 = dma.done [#allocation7], 64
    $region33: #{tpu_custom_call.1} parent=1 // pred_fallthru
      _
    %57 = sfence
    %v58 = vld [vmem:[%s4] sm:$0xff]
    %s59 = scalar_lea.vmem %s4, 8
    %v60 = vld [vmem:[%s59] sm:$0xff]
    %s61 = sld [smem:[#allocation3]]
    %v62 = vstv %s61
    %v63 = vmul.f32 %v58, %v62
    %s64 = sld [smem:[#allocation3 + $0x80]]
    %v65 = vstv %s64
    %v66 = vmul.f32 %v60, %v65
    %v67 = vadd.f32 %v63, %v66
    %s68 = sld [smem:[#allocation6]]
    %v69 = vstv %s68
    %v70 = vadd.f32 %v67, %v69
    %v71 = vxor.u32 %v70, 2147483648
    %v72 = vmul.f32 %v71, 1.442695
    %v73 = vpow.pop %v72
    %v74 = vadd.f32 %v73, 1.0
    %v75 = vrcp.pop %v74
    %v76 = vmul.f32 1.0, %v75
    %s77 = sld [smem:[#allocation8]]
    %v78 = vstv %s77
    %v79 = vmul.f32 %v76, %v78
    %s80 = sld [smem:[#allocation3 + $0x1]]
    %v81 = vstv %s80
    %v82 = vmul.f32 %v58, %v81
    %s83 = sld [smem:[#allocation3 + $0x81]]
    %v84 = vstv %s83
    %v85 = vmul.f32 %v60, %v84
    %v86 = vadd.f32 %v82, %v85
    %s87 = sld [smem:[#allocation6 + $0x1]]
    %v88 = vstv %s87
    %v89 = vadd.f32 %v86, %v88
    %v90 = vxor.u32 %v89, 2147483648
    %v91 = vmul.f32 %v90, 1.442695
    %v92 = vpow.pop %v91
    %v93 = vadd.f32 %v92, 1.0
    %v94 = vrcp.pop %v93
    %v95 = vmul.f32 1.0, %v94
    %s96 = sld [smem:[#allocation8 + $0x80]]
    %v97 = vstv %s96
    %v98 = vmul.f32 %v95, %v97
    %s99 = sld [smem:[#allocation3 + $0x2]]
    %v100 = vstv %s99
    %v101 = vmul.f32 %v58, %v100
    %s102 = sld [smem:[#allocation3 + $0x82]]
    %v103 = vstv %s102
    %v104 = vmul.f32 %v60, %v103
    %v105 = vadd.f32 %v101, %v104
    %s106 = sld [smem:[#allocation6 + $0x2]]
    %v107 = vstv %s106
    %v108 = vadd.f32 %v105, %v107
    %v109 = vxor.u32 %v108, 2147483648
    %v110 = vmul.f32 %v109, 1.442695
    %v111 = vpow.pop %v110
    %v112 = vadd.f32 %v111, 1.0
    %v113 = vrcp.pop %v112
    %v114 = vmul.f32 1.0, %v113
    %s115 = sld [smem:[#allocation8 + $0x100]]
    %v116 = vstv %s115
    %v117 = vmul.f32 %v114, %v116
    %s118 = sld [smem:[#allocation3 + $0x3]]
    %v119 = vstv %s118
    %v120 = vmul.f32 %v58, %v119
    %s121 = sld [smem:[#allocation3 + $0x83]]
    %v122 = vstv %s121
    %v123 = vmul.f32 %v60, %v122
    %v124 = vadd.f32 %v120, %v123
    %s125 = sld [smem:[#allocation6 + $0x3]]
    %v126 = vstv %s125
    %v127 = vadd.f32 %v124, %v126
    %v128 = vxor.u32 %v127, 2147483648
    %v129 = vmul.f32 %v128, 1.442695
    %v130 = vpow.pop %v129
    %v131 = vadd.f32 %v130, 1.0
    %v132 = vrcp.pop %v131
    %v133 = vmul.f32 1.0, %v132
    %s134 = sld [smem:[#allocation8 + $0x180]]
    %v135 = vstv %s134
    %v136 = vmul.f32 %v133, %v135
    %v137 = vadd.f32 %v79, %v98
    %v138 = vadd.f32 %v117, %v136
    %v139 = vadd.f32 %v137, %v138
    %s140 = sld [smem:[#allocation2]]
    %v141 = vstv %s140
    %v142 = vadd.f32 %v139, %v141
    %v143 = vxor.u32 %v142, 2147483648
    %v144 = vmul.f32 %v143, 1.442695
    %v145 = vpow.pop %v144
    %v146 = vadd.f32 %v145, 1.0
    %v147 = vrcp.pop %v146
    %v148 = vmul.f32 1.0, %v147
    %149 = vst [vmem:[#allocation9] sm:$0xff] %v148
    // Predicated region
    $region34: #{tpu_custom_call.1} parent=1 // pred_check
      _
    $region35: #{tpu_custom_call.1} parent=1 // pred_check_branch
      %151 = sbr.rel (0) target = $region37
    $region36: #{tpu_custom_call.1} parent=1 // pred_region
      %s153 = ssub.s32 128, 128
      %154 = vsyncadd [#allocation4], %s153
      %s156 = sshll.u32 [#allocation9], 4
      %s157 = int_to_ptr.vmem [resolvable:$true] %s156
      %159 = dma.vmem_to_hbm [thread:$0]  %s157, 128, %s5, [#allocation4]
    $region37: #{tpu_custom_call.1} parent=1 // pred_fallthru
      _
    // Predicated region
    $region38: #{tpu_custom_call.1} parent=1 // pred_check
      _
    $region39: #{tpu_custom_call.1} parent=1 // pred_check_branch
      %161 = sbr.rel (0) target = $region41
    $region40: #{tpu_custom_call.1} parent=1 // pred_region
      %162 = dma.done [#allocation4], 128
    $region41: #{tpu_custom_call.1} parent=1 // pred_fallthru
      _
    %163 = vsyncpa [#allocation4], 1
    %164 = vsyncpa [#allocation5], 1
    %165 = vsyncpa [#allocation7], 1

</llo_original>
